<compile_context>
chip_gen: v7x
topology: tpu7x:2x2x1
jax: 0.10.0
libtpu: 0.0.40
codegen_flags: <defaults>
</compile_context>

<pallas_src>
import functools

import jax
import jax.numpy as jnp
from jax import lax
from jax.experimental import pallas as pl
from jax.experimental.pallas import tpu as pltpu

KL_WEIGHT = 1.0   # stands in for settings.kl_weight
TAU = 1.0         # gumbel-softmax temperature (argmax is invariant to tau > 0)
EPS = 1e-6


def _round_up(x, m):
    return (x + m - 1) // m * m


# --------------------------------------------------------------------------------------
# Kernel
# --------------------------------------------------------------------------------------
def _vq_kernel(x_ref, p_ref, ppr_ref, ppc_ref, g_ref, q_ref, st_ref, *, batch, tile_m):
    f32 = jnp.float32
    x = x_ref[...]                    # (TM, D) native dtype (streamed tile)
    p = p_ref[...]                    # (K, D)  native dtype (resident codebook)
    tm = x.shape[0]
    k = p.shape[0]

    # ------------- lane-dense (K, TM) section: softmax / log-softmax / prior sums ------
    # logits^T = 2 * (p @ x^T) - ||p||^2.  The per-row ||x||^2 shift is dropped: the
    # softmax, the log-softmax and the argmax below are all invariant to it.
    xpT = lax.dot_general(p, x, dimension_numbers=(((1,), (1,)), ((), ())),
                          preferred_element_type=f32)                    # (K, TM) MXU
    logitsT = 2.0 * xpT - ppc_ref[...]                                   # (K, TM)
    mxT = jnp.max(logitsT, axis=0, keepdims=True)                        # (1, TM)
    zT = logitsT - mxT
    eT = jnp.exp(zT)                                                     # EUP, K*TM
    sT = jnp.sum(eT, axis=0, keepdims=True)                              # (1, TM)
    inv_sT = 1.0 / sT                 # per-row: only TM elements; kept exact so the loss
                                      # matches the reference to 1e-5 (approx EUP recip
                                      # would save nothing measurable here anyway).
    logprobsT = zT - jnp.log(sT)                                         # (K, TM)
    probsT = eT * inv_sT              # single exp reused for probs and logprobs

    if batch % tile_m != 0:           # static: only taken on the padded-batch fallback
        col = pl.program_id(0) * tile_m + lax.broadcasted_iota(jnp.int32, (1, tm), 1)
        validT = (col < batch).astype(f32)                               # (1, TM)
        probsT = probsT * validT
        logprobsT = logprobsT * validT

    sp = jnp.sum(probsT, axis=1, keepdims=True)                          # (K, 1)
    sl = jnp.sum(logprobsT, axis=1, keepdims=True)                       # (K, 1)
    st_ref[...] = jnp.concatenate([sp, sl], axis=1)[None]                # (1, K, 2)

    # ------------- natural (TM, K) section: hard gumbel-softmax sample + quantize ------
    # Re-deriving the logits row-major via a second (tiny) MXU matmul is cheaper and
    # safer than transposing either the gumbel stream or the one-hot matrix.
    xp = lax.dot_general(x, p, dimension_numbers=(((1,), (1,)), ((), ())),
                         preferred_element_type=f32)                     # (TM, K) MXU
    y = 2.0 * xp - ppr_ref[...] + g_ref[...].astype(f32)     # (logits + g) / tau, tau=1
    ymax = jnp.max(y, axis=-1, keepdims=True)                            # (TM, 1)
    kio = lax.broadcasted_iota(jnp.int32, (tm, k), 1)
    first = jnp.min(jnp.where(y == ymax, kio, k), axis=-1, keepdims=True)  # first on ties
    onehot = (kio == first).astype(p.dtype)                  # 0/1 exact even in bf16
    q = jnp.dot(onehot, p, preferred_element_type=f32)                   # (TM, D) MXU
    q_ref[...] = q.astype(q_ref.dtype)


# --------------------------------------------------------------------------------------
# Wrapper
# --------------------------------------------------------------------------------------
def _choose_tiling(batch, tm_target):
    """(tile_m, num_tiles, pad_rows).  Prefer a tile that divides B (no wrapper pad)."""
    tm_target = max(8, (tm_target // 8) * 8)
    if batch <= tm_target:
        return batch, 1, 0
    t = tm_target
    while t >= 8:
        if batch % t == 0 and 4 * t >= tm_target:   # reject uselessly small tiles
            return t, batch // t, 0
        t -= 8
    b_pad = _round_up(batch, tm_target)             # rare fallback: pad + in-kernel mask
    return tm_target, b_pad // tm_target, b_pad - batch


def _finalize_loss(stats, batch, kl_weight):
    """Tiny K-length epilogue in plain JAX: prior / KL (batchmean) / entropy."""
    sums = jnp.sum(stats, axis=0)                    # (K, 2)
    sum_probs, sum_logprobs = sums[:, 0], sums[:, 1]
    prior = sum_probs / batch + EPS                  # mean_b(exp(logprobs) + eps)
    log_prior = jnp.log(prior)
    sum_plogp = jnp.sum(prior * log_prior)
    capacity = sum_plogp - jnp.sum(prior * sum_logprobs) / batch   # KLDivLoss, batchmean
    ent = -sum_plogp
    return kl_weight * capacity + 0.01 * ent


def vq_forward(latents, prototypes, gumbel, *, tm=512, kl_weight=KL_WEIGHT):
    """quantized, vq_loss = vq_forward(latents (B,D), prototypes (K,D), gumbel (B,K)).

    Streams stay in their native dtype (pass bf16 for ~2x HBM traffic savings); q is
    returned in the latents dtype.  On v6e raise tm toward 1024 for large B; on v7x
    keep tm small enough that the grid has >= 2 tiles for the two TensorCores.
    """
    B, D = latents.shape
    K = prototypes.shape[0]
    tile_m, nt, pad = _choose_tiling(B, tm)
    b_total = nt * tile_m

    x, g = latents, gumbel
    if pad:                                          # rare fallback only
        x = jnp.pad(x, ((0, pad), (0, 0)))
        g = jnp.pad(g, ((0, pad), (0, 0)))

    # Hoisted ||p||^2 (K elements, f32) in both orientations so neither kernel section
    # needs an in-kernel relayout.
    p32 = prototypes.astype(jnp.float32)
    pp = jnp.sum(p32 * p32, axis=-1)
    pp_row = pp[None, :]                             # (1, K)
    pp_col = pp[:, None]                             # (K, 1)

    in_b = jnp.dtype(latents.dtype).itemsize
    g_b = jnp.dtype(gumbel.dtype).itemsize
    p_b = jnp.dtype(prototypes.dtype).itemsize
    out_b = in_b

    # Double-buffered streaming tiles + resident codebook, with headroom; capped at
    # v7x's 64 MiB physical VMEM (v5e/v6e have 128 MiB but a lower scoped default).
    stream = tile_m * (D * in_b + K * g_b + D * out_b) + K * 2 * 4
    resident = K * D * p_b + 2 * K * 4
    vmem_limit = int(min(max(2 * (stream + resident) + (8 << 20), 16 << 20), 64 << 20))

    cost = pl.CostEstimate(
        flops=6 * B * K * D,                          # three MXU matmuls of 2*B*K*D
        transcendentals=B * K + 2 * B,                # exp on (B,K); log / recip per row
        bytes_accessed=int(B * D * in_b + B * K * g_b + K * D * p_b
                           + B * D * out_b + nt * K * 8 + 8 * K),
    )

    kernel = functools.partial(_vq_kernel, batch=B, tile_m=tile_m)
    q, stats = pl.pallas_call(
        kernel,
        out_shape=(jax.ShapeDtypeStruct((b_total, D), latents.dtype),
                   jax.ShapeDtypeStruct((nt, K, 2), jnp.float32)),
        grid=(nt,),
        in_specs=[
            pl.BlockSpec((tile_m, D), lambda i: (i, 0)),    # latents tile (streamed)
            pl.BlockSpec((K, D), lambda i: (0, 0)),         # prototypes (resident)
            pl.BlockSpec((1, K), lambda i: (0, 0)),         # ||p||^2 row (resident)
            pl.BlockSpec((K, 1), lambda i: (0, 0)),         # ||p||^2 col (resident)
            pl.BlockSpec((tile_m, K), lambda i: (i, 0)),    # gumbel tile (streamed)
        ],
        out_specs=(
            pl.BlockSpec((tile_m, D), lambda i: (i, 0)),    # quantized latents
            pl.BlockSpec((1, K, 2), lambda i: (i, 0, 0)),   # per-tile (Σprobs, Σlogprobs)
        ),
        compiler_params=pltpu.CompilerParams(
            dimension_semantics=("parallel",),              # batch tiles across TCs
            vmem_limit_bytes=vmem_limit),
        cost_estimate=cost,
    )(x, prototypes, pp_row, pp_col, g)

    if b_total != B:
        q = q[:B]
    return q, _finalize_loss(stats, B, kl_weight)


# --------------------------------------------------------------------------------------
# Pure-JAX reference (identical semantics, for the correctness check)
# --------------------------------------------------------------------------------------
def vq_forward_ref(latents, prototypes, gumbel):
    x = latents.astype(jnp.float32)
    p = prototypes.astype(jnp.float32)
    B = x.shape[0]
    diffs = x[:, None, :] - p[None, :, :]
    logits = -jnp.sum(diffs * diffs, axis=2)
    logprobs = jax.nn.log_softmax(logits, axis=-1)
    idx = jnp.argmax((logits + gumbel) / TAU, axis=-1)
    onehot = jax.nn.one_hot(idx, p.shape[0], dtype=jnp.float32)
    quantized = onehot @ p
    prior = jnp.mean(jnp.exp(logprobs) + EPS, axis=0, keepdims=True)
    prior_e = jnp.broadcast_to(prior, logprobs.shape)
    capacity = jnp.sum(prior_e * (jnp.log(prior_e) - logprobs)) / B
    ent = jnp.sum(-prior[0] * jnp.log(prior[0]))
    return quantized, KL_WEIGHT * capacity + 0.01 * ent


if __name__ == "__main__":
    B, latent_dim, num_protos = 8, 32, 16

    key = jax.random.PRNGKey(0)
    k_lat, k_proto, k_gumbel = jax.random.split(key, 3)

    latents = jax.random.normal(k_lat, (B, latent_dim), dtype=jnp.float32)
    # prototypes.data.uniform_(-1, 1)
    prototypes = jax.random.uniform(k_proto, (num_protos, latent_dim),
                                    minval=-1.0, maxval=1.0, dtype=jnp.float32)
    # deterministic gumbel noise: -log(-log(U))
    u = jax.random.uniform(k_gumbel, (B, num_protos), minval=1e-6, maxval=1.0 - 1e-6)
    gumbel = -jnp.log(-jnp.log(u))

    q, vq_loss = vq_forward(latents, prototypes, gumbel)
    jax.block_until_ready((q, vq_loss))

    q_ref, loss_ref = vq_forward_ref(latents, prototypes, gumbel)
    assert jnp.allclose(q, q_ref, atol=1e-5), "quantized latents mismatch"
    assert jnp.allclose(vq_loss, loss_ref, atol=1e-5), "vq_loss mismatch"

    print("KERNEL_OK")
</pallas_src>

<mosaic_0001>
module attributes {stable_mosaic.version = 11 : i64} {
  func.func @_vq_kernel(%arg0: i32, %arg1: memref<8x32xf32, #tpu.memory_space<vmem>>, %arg2: memref<16x32xf32, #tpu.memory_space<vmem>>, %arg3: memref<1x16xf32, #tpu.memory_space<vmem>>, %arg4: memref<16x1xf32, #tpu.memory_space<vmem>>, %arg5: memref<8x16xf32, #tpu.memory_space<vmem>>, %arg6: memref<8x32xf32, #tpu.memory_space<vmem>>, %arg7: memref<1x16x2xf32, #tpu.memory_space<vmem>>) attributes {dimension_semantics = [#tpu.dimension_semantics<parallel>], iteration_bounds = array<i64: 1>, scalar_prefetch = 0 : i64, scratch_operands = 0 : i64, tpu.core_type = #tpu.core_type<tc>, window_params = [{transform_indices = @transform_0, window_bounds = array<i64: 8, 32>}, {pipeline_mode = #tpu.pipeline_mode<synchronous>, transform_indices = @transform_1, window_bounds = array<i64: 16, 32>}, {pipeline_mode = #tpu.pipeline_mode<synchronous>, transform_indices = @transform_2, window_bounds = array<i64: 1, 16>}, {pipeline_mode = #tpu.pipeline_mode<synchronous>, transform_indices = @transform_3, window_bounds = array<i64: 16, 1>}, {transform_indices = @transform_4, window_bounds = array<i64: 8, 16>}, {transform_indices = @transform_5, window_bounds = array<i64: 8, 32>}, {transform_indices = @transform_6, window_bounds = array<i64: 1, 16, 2>}]} {
    %c0 = arith.constant 0 : index
    %c0_0 = arith.constant 0 : index
    %0 = vector.load %arg1[%c0, %c0_0] : memref<8x32xf32, #tpu.memory_space<vmem>>, vector<8x32xf32>
    %c0_1 = arith.constant 0 : index
    %c0_2 = arith.constant 0 : index
    %1 = vector.load %arg2[%c0_1, %c0_2] : memref<16x32xf32, #tpu.memory_space<vmem>>, vector<16x32xf32>
    %cst = arith.constant dense<0.000000e+00> : vector<16x8xf32>
    %2 = tpu.matmul %1, %0, %cst {dimension_numbers = #tpu.dot_dimension_numbers<[1], [1], [0], [0], [0, 0, 1, 0], [], []>} : vector<16x32xf32>, vector<8x32xf32>, vector<16x8xf32> -> vector<16x8xf32>
    %cst_3 = arith.constant 2.000000e+00 : f32
    %3 = vector.broadcast %cst_3 : f32 to vector<16x8xf32>
    %4 = arith.mulf %3, %2 : vector<16x8xf32>
    %c0_4 = arith.constant 0 : index
    %c0_5 = arith.constant 0 : index
    %5 = vector.load %arg4[%c0_4, %c0_5] : memref<16x1xf32, #tpu.memory_space<vmem>>, vector<16x1xf32>
    %6 = vector.broadcast %5 : vector<16x1xf32> to vector<16x8xf32>
    %7 = arith.subf %4, %6 : vector<16x8xf32>
    %cst_6 = arith.constant dense<0xFF800000> : vector<8xf32>
    %8 = vector.multi_reduction <maximumf>, %7, %cst_6 [0] : vector<16x8xf32> to vector<8xf32>
    %9 = vector.shape_cast %8 : vector<8xf32> to vector<1x8xf32>
    %10 = vector.broadcast %9 : vector<1x8xf32> to vector<16x8xf32>
    %11 = arith.subf %7, %10 : vector<16x8xf32>
    %12 = math.exp %11 : vector<16x8xf32>
    %cst_7 = arith.constant dense<0.000000e+00> : vector<8xf32>
    %13 = vector.multi_reduction <add>, %12, %cst_7 [0] : vector<16x8xf32> to vector<8xf32>
    %14 = vector.shape_cast %13 : vector<8xf32> to vector<1x8xf32>
    %cst_8 = arith.constant 1.000000e+00 : f32
    %15 = vector.broadcast %cst_8 : f32 to vector<1x8xf32>
    %16 = arith.divf %15, %14 : vector<1x8xf32>
    %17 = math.log %14 : vector<1x8xf32>
    %18 = vector.broadcast %17 : vector<1x8xf32> to vector<16x8xf32>
    %19 = arith.subf %11, %18 : vector<16x8xf32>
    %20 = vector.broadcast %16 : vector<1x8xf32> to vector<16x8xf32>
    %21 = arith.mulf %12, %20 : vector<16x8xf32>
    %cst_9 = arith.constant dense<0.000000e+00> : vector<16xf32>
    %22 = vector.multi_reduction <add>, %21, %cst_9 [1] : vector<16x8xf32> to vector<16xf32>
    %23 = vector.shape_cast %22 : vector<16xf32> to vector<16x1xf32>
    %cst_10 = arith.constant dense<0.000000e+00> : vector<16xf32>
    %24 = vector.multi_reduction <add>, %19, %cst_10 [1] : vector<16x8xf32> to vector<16xf32>
    %25 = vector.shape_cast %24 : vector<16xf32> to vector<16x1xf32>
    %26 = tpu.concatenate %23, %25 in 1 : vector<16x1xf32>, vector<16x1xf32> -> vector<16x2xf32>
    %27 = vector.shape_cast %26 : vector<16x2xf32> to vector<1x16x2xf32>
    %c0_11 = arith.constant 0 : index
    %c0_12 = arith.constant 0 : index
    %c0_13 = arith.constant 0 : index
    %28 = vector.load %arg7[%c0_11, %c0_12, %c0_13] : memref<1x16x2xf32, #tpu.memory_space<vmem>>, vector<1x16x2xf32>
    tpu.vector_store %arg7[%c0_11, %c0_12, %c0_13], %27 {strides = array<i32>} : memref<1x16x2xf32, #tpu.memory_space<vmem>>, vector<1x16x2xf32>,
    %cst_14 = arith.constant dense<0.000000e+00> : vector<8x16xf32>
    %29 = tpu.matmul %0, %1, %cst_14 {dimension_numbers = #tpu.dot_dimension_numbers<[1], [1], [0], [0], [0, 0, 1, 0], [], []>} : vector<8x32xf32>, vector<16x32xf32>, vector<8x16xf32> -> vector<8x16xf32>
    %cst_15 = arith.constant 2.000000e+00 : f32
    %30 = vector.broadcast %cst_15 : f32 to vector<8x16xf32>
    %31 = arith.mulf %30, %29 : vector<8x16xf32>
    %c0_16 = arith.constant 0 : index
    %c0_17 = arith.constant 0 : index
    %32 = vector.load %arg3[%c0_16, %c0_17] : memref<1x16xf32, #tpu.memory_space<vmem>>, vector<1x16xf32>
    %33 = vector.broadcast %32 : vector<1x16xf32> to vector<8x16xf32>
    %34 = arith.subf %31, %33 : vector<8x16xf32>
    %c0_18 = arith.constant 0 : index
    %c0_19 = arith.constant 0 : index
    %35 = vector.load %arg5[%c0_18, %c0_19] : memref<8x16xf32, #tpu.memory_space<vmem>>, vector<8x16xf32>
    %36 = arith.addf %34, %35 : vector<8x16xf32>
    %cst_20 = arith.constant dense<0xFF800000> : vector<8xf32>
    %37 = vector.multi_reduction <maximumf>, %36, %cst_20 [1] : vector<8x16xf32> to vector<8xf32>
    %38 = vector.shape_cast %37 : vector<8xf32> to vector<8x1xf32>
    %39 = tpu.iota {dimensions = array<i32: 1>} : vector<8x16xi32>
    %40 = vector.broadcast %38 : vector<8x1xf32> to vector<8x16xf32>
    %41 = arith.cmpf oeq, %36, %40 : vector<8x16xf32>
    %c16_i32 = arith.constant 16 : i32
    %42 = vector.broadcast %c16_i32 : i32 to vector<8x16xi32>
    %43 = arith.select %41, %39, %42 : vector<8x16xi1>, vector<8x16xi32>
    %cst_21 = arith.constant dense<2147483647> : vector<8xi32>
    %44 = vector.multi_reduction <minsi>, %43, %cst_21 [1] : vector<8x16xi32> to vector<8xi32>
    %45 = vector.shape_cast %44 : vector<8xi32> to vector<8x1xi32>
    %46 = vector.broadcast %45 : vector<8x1xi32> to vector<8x16xi32>
    %47 = arith.cmpi eq, %39, %46 : vector<8x16xi32>
    %48 = arith.extui %47 : vector<8x16xi1> to vector<8x16xi32>
    %49 = arith.sitofp %48 : vector<8x16xi32> to vector<8x16xf32>
    %cst_22 = arith.constant dense<0.000000e+00> : vector<8x32xf32>
    %50 = tpu.matmul %49, %1, %cst_22 {dimension_numbers = #tpu.dot_dimension_numbers<[1], [0], [0], [1], [0, 0, 1, 1], [], []>} : vector<8x16xf32>, vector<16x32xf32>, vector<8x32xf32> -> vector<8x32xf32>
    %c0_23 = arith.constant 0 : index
    %c0_24 = arith.constant 0 : index
    %51 = vector.load %arg6[%c0_23, %c0_24] : memref<8x32xf32, #tpu.memory_space<vmem>>, vector<8x32xf32>
    tpu.vector_store %arg6[%c0_23, %c0_24], %50 {strides = array<i32>} : memref<8x32xf32, #tpu.memory_space<vmem>>, vector<8x32xf32>,
    return
  }
  func.func @transform_0(%arg0: i32) -> (i32, i32) {
    %c0_i32 = arith.constant 0 : i32
    %c0_i32_0 = arith.constant 0 : i32
    return %arg0, %c0_i32 : i32, i32
  }
  func.func @transform_1(%arg0: i32) -> (i32, i32) {
    %c0_i32 = arith.constant 0 : i32
    %c0_i32_0 = arith.constant 0 : i32
    %c0_i32_1 = arith.constant 0 : i32
    return %c0_i32, %c0_i32_0 : i32, i32
  }
  func.func @transform_2(%arg0: i32) -> (i32, i32) {
    %c0_i32 = arith.constant 0 : i32
    %c0_i32_0 = arith.constant 0 : i32
    %c0_i32_1 = arith.constant 0 : i32
    return %c0_i32, %c0_i32_0 : i32, i32
  }
  func.func @transform_3(%arg0: i32) -> (i32, i32) {
    %c0_i32 = arith.constant 0 : i32
    %c0_i32_0 = arith.constant 0 : i32
    %c0_i32_1 = arith.constant 0 : i32
    return %c0_i32, %c0_i32_0 : i32, i32
  }
  func.func @transform_4(%arg0: i32) -> (i32, i32) {
    %c0_i32 = arith.constant 0 : i32
    %c0_i32_0 = arith.constant 0 : i32
    return %arg0, %c0_i32 : i32, i32
  }
  func.func @transform_5(%arg0: i32) -> (i32, i32) {
    %c0_i32 = arith.constant 0 : i32
    %c0_i32_0 = arith.constant 0 : i32
    return %arg0, %c0_i32 : i32, i32
  }
  func.func @transform_6(%arg0: i32) -> (i32, i32, i32) {
    %c0_i32 = arith.constant 0 : i32
    %c0_i32_0 = arith.constant 0 : i32
    %c0_i32_1 = arith.constant 0 : i32
    return %arg0, %c0_i32, %c0_i32_0 : i32, i32, i32
  }
}

</mosaic_0001>

<llo_original>
// kernel: tpu_custom_call.1
$region0: #{tpu_custom_call.1}
  #allocation0 [shape = 'u32[]', space=smem, size = 0x4, offset = 0x4, fixed_abs, tag = 'smem constant byte address 0x4 - core index']
  #allocation1 [shape = 'u32[144,128]{1,0:T(1,128)}', space=vmem, size = 0x12000, scoped, tag = 'internal scratch']
  %s0 = inlined_call_operand.hbm [shape: f32[8,32], index: 0, kind: input, shape index: {}]
  %s1 = inlined_call_operand.vmem [shape: f32[16,32], index: 1, kind: input, shape index: {}]
  %s2 = inlined_call_operand.hbm [shape: f32[1,16], index: 2, kind: input, shape index: {}]
  %s3 = inlined_call_operand.vmem [shape: f32[16,1], index: 3, kind: input, shape index: {}]
  %s4 = inlined_call_operand.vmem [shape: f32[8,16], index: 4, kind: input, shape index: {}]
  %s5 = inlined_call_operand.hbm [shape: f32[8,32], index: 5, kind: output, shape index: {0}]
  %s6 = inlined_call_operand.vmem [shape: f32[1,16,2], index: 6, kind: output, shape index: {1}]
  %7 = xla_tuple %s5, %s6
  %s8 = sld [smem:[#allocation0]]
  $region46: #{tpu_custom_call.1} parent=0
    _
  %s10 = ssub.s32 1, %s8
  %s11 = scalar_select 0, %s10, %s8
  $region1: #{tpu_custom_call.1} parent=0
    #allocation2 [shape = 'u8[4096]{0}', space=vmem, size = 0x1000, scoped, tag = 'input window, operand 0, single buffered']
    #allocation3 [shape = 's32[1]{0}', space=sflag, size = 0x4, scoped, tag = 'scoped memory for tpu_custom_call.1']
    #allocation4 [shape = 's32[1]{0}', space=sflag, size = 0x4, scoped, tag = 'scoped memory for tpu_custom_call.1']
    #allocation5 [shape = 'u8[512]{0}', space=vmem, size = 0x400, scoped, tag = 'input window, operand 2, single buffered']
    #allocation6 [shape = 's32[1]{0}', space=sflag, size = 0x4, scoped, tag = 'scoped memory for tpu_custom_call.1']
    #allocation7 [shape = 'u8[4096]{0}', space=vmem, size = 0x1000, scoped, tag = 'output window, operand 0, single buffered']
    %12 = vsyncpa [#allocation3], 0
    %13 = vsyncpa [#allocation6], 0
    %14 = vsyncpa [#allocation4], 0
    // Predicated region
    $region2: #{tpu_custom_call.1} parent=1 // pred_check
      _
    $region3: #{tpu_custom_call.1} parent=1 // pred_check_branch
      %16 = sbr.rel (0) target = $region5
    $region4: #{tpu_custom_call.1} parent=1 // pred_region
      %s18 = ssub.s32 128, 128
      %19 = vsyncadd [#allocation3], %s18
      %s21 = sshll.u32 [#allocation2], 4
      %s22 = int_to_ptr.vmem [resolvable:$true] %s21
      %24 = dma.hbm_to_vmem [thread:$0]  %s0, 128, %s22, [#allocation3]
    $region5: #{tpu_custom_call.1} parent=1 // pred_fallthru
      _
    // Predicated region
    $region6: #{tpu_custom_call.1} parent=1 // pred_check
      _
    $region7: #{tpu_custom_call.1} parent=1 // pred_check_branch
      %26 = sbr.rel (0) target = $region9
    $region8: #{tpu_custom_call.1} parent=1 // pred_region
      _
    $region9: #{tpu_custom_call.1} parent=1 // pred_fallthru
      _
    // Predicated region
    $region10: #{tpu_custom_call.1} parent=1 // pred_check
      _
    $region11: #{tpu_custom_call.1} parent=1 // pred_check_branch
      %28 = sbr.rel (0) target = $region13
    $region12: #{tpu_custom_call.1} parent=1 // pred_region
      %s30 = ssub.s32 16, 16
      %31 = vsyncadd [#allocation6], %s30
      %s33 = sshll.u32 [#allocation5], 4
      %s34 = int_to_ptr.vmem [resolvable:$true] %s33
      %36 = dma.hbm_to_vmem [thread:$0]  %s2, 16, %s34, [#allocation6]
    $region13: #{tpu_custom_call.1} parent=1 // pred_fallthru
      _
    // Predicated region
    $region14: #{tpu_custom_call.1} parent=1 // pred_check
      _
    $region15: #{tpu_custom_call.1} parent=1 // pred_check_branch
      %38 = sbr.rel (0) target = $region17
    $region16: #{tpu_custom_call.1} parent=1 // pred_region
      _
    $region17: #{tpu_custom_call.1} parent=1 // pred_fallthru
      _
    // Predicated region
    $region18: #{tpu_custom_call.1} parent=1 // pred_check
      _
    $region19: #{tpu_custom_call.1} parent=1 // pred_check_branch
      %40 = sbr.rel (0) target = $region21
    $region20: #{tpu_custom_call.1} parent=1 // pred_region
      _
    $region21: #{tpu_custom_call.1} parent=1 // pred_fallthru
      _
    // Predicated region
    $region22: #{tpu_custom_call.1} parent=1 // pred_check
      _
    $region23: #{tpu_custom_call.1} parent=1 // pred_check_branch
      %42 = sbr.rel (0) target = $region25
    $region24: #{tpu_custom_call.1} parent=1 // pred_region
      %43 = dma.done [#allocation3], 128
    $region25: #{tpu_custom_call.1} parent=1 // pred_fallthru
      _
    // Predicated region
    $region26: #{tpu_custom_call.1} parent=1 // pred_check
      _
    $region27: #{tpu_custom_call.1} parent=1 // pred_check_branch
      %45 = sbr.rel (0) target = $region29
    $region28: #{tpu_custom_call.1} parent=1 // pred_region
      %46 = dma.done [#allocation6], 16
    $region29: #{tpu_custom_call.1} parent=1 // pred_fallthru
      _
    %v47 = vld [vmem:[#allocation2] sm:$0xff]
    %v48 = vld [vmem:[%s1] sm:$0xff]
    %v49 = vld [vmem:[%s1 + $0x8] sm:$0xff]
    %vm50 = vcmask 261120
    %v52 = vsel %vm50, %v48, 0
    %v55 = vsel %vm50, %v49, 0
    %v58 = vsel %vm50, %v47, 0
    %60 = vmatprep.subr.mxu0 0.0
    %61 = vmatpush1.xpose.msra.mxu0 %v58
    %62 = vmatprep.subr.mxu0 0.0
    %63 = vmatpush1.xpose.msra.mxu0 0.0
    %64 = vmatprep.subr.mxu0 0.0
    %65 = vmatpush1.xpose.msra.mxu0 0.0
    %66 = vmatprep.subr.mxu0 0.0
    %67 = vmatpush1.xpose.msra.mxu0 0.0
    %68 = vmatprep.subr.mxu0 0.0
    %69 = vmatpush1.xpose.msra.mxu0 0.0
    %70 = vmatprep.subr.mxu0 0.0
    %71 = vmatpush1.xpose.msra.mxu0 0.0
    %72 = vmatprep.subr.mxu0 0.0
    %73 = vmatpush1.xpose.msra.mxu0 0.0
    %74 = vmatprep.subr.mxu0 0.0
    %75 = vmatpush1.xpose.msra.mxu0 0.0
    %76 = vmatprep.subr.mxu0 0.0
    %77 = vmatpush1.xpose.msra.mxu0 0.0
    %78 = vmatprep.subr.mxu0 0.0
    %79 = vmatpush1.xpose.msra.mxu0 0.0
    %80 = vmatprep.subr.mxu0 0.0
    %81 = vmatpush1.xpose.msra.mxu0 0.0
    %82 = vmatprep.subr.mxu0 0.0
    %83 = vmatpush1.xpose.msra.mxu0 0.0
    %84 = vmatprep.subr.mxu0 0.0
    %85 = vmatpush1.xpose.msra.mxu0 0.0
    %86 = vmatprep.subr.mxu0 0.0
    %87 = vmatpush1.xpose.msra.mxu0 0.0
    %88 = vmatprep.subr.mxu0 0.0
    %89 = vmatpush1.xpose.msra.mxu0 0.0
    %90 = vmatprep.subr.mxu0 0.0
    %91 = vmatpush1.xpose.msra.mxu0 0.0
    %92 = vmatprep.subr.mxu0 0.0
    %93 = vmatpush1.xpose.msra.mxu0 0.0
    %94 = vmatprep.subr.mxu0 0.0
    %95 = vmatpush1.xpose.msra.mxu0 0.0
    %96 = vmatprep.subr.mxu0 0.0
    %97 = vmatpush1.xpose.msra.mxu0 0.0
    %98 = vmatprep.subr.mxu0 0.0
    %99 = vmatpush1.xpose.msra.mxu0 0.0
    %100 = vmatprep.subr.mxu0 0.0
    %101 = vmatpush1.xpose.msra.mxu0 0.0
    %102 = vmatprep.subr.mxu0 0.0
    %103 = vmatpush1.xpose.msra.mxu0 0.0
    %104 = vmatprep.subr.mxu0 0.0
    %105 = vmatpush1.xpose.msra.mxu0 0.0
    %106 = vmatprep.subr.mxu0 0.0
    %107 = vmatpush1.xpose.msra.mxu0 0.0
    %108 = vmatprep.subr.mxu0 0.0
    %109 = vmatpush1.xpose.msra.mxu0 0.0
    %110 = vmatprep.subr.mxu0 0.0
    %111 = vmatpush1.xpose.msra.mxu0 0.0
    %112 = vmatprep.subr.mxu0 0.0
    %113 = vmatpush1.xpose.msra.mxu0 0.0
    %114 = vmatprep.subr.mxu0 0.0
    %115 = vmatpush1.xpose.msra.mxu0 0.0
    %116 = vmatprep.subr.mxu0 0.0
    %117 = vmatpush1.xpose.msra.mxu0 0.0
    %118 = vmatprep.subr.mxu0 0.0
    %119 = vmatpush1.xpose.msra.mxu0 0.0
    %120 = vmatprep.subr.mxu0 0.0
    %121 = vmatpush1.xpose.msra.mxu0 0.0
    %122 = vmatprep.subr.mxu0 0.0
    %123 = vmatpush1.xpose.msra.mxu0 0.0
    %124 = vmatprep.mubr.f32.mxu0 0.0
    %125 = vmatmul.mubr.f32.gmra.mrb[0].mxu0 %v52
    %v126 = vpop.f32.mrb[0].mxu0
    %v127 = vadd.f32 0.0, %v126
    %v128 = vpop.f32.mrb[0].mxu0
    %129 = vmatprep.mubr.f32.mxu0 0.0
    %130 = vmatmul.mubr.f32.gmra.mrb[0].mxu0 %v55
    %v131 = vpop.f32.mrb[0].mxu0
    %v132 = vadd.f32 0.0, %v131
    %v133 = vpop.f32.mrb[0].mxu0
    %134 = vdwg.mxu0
    %v135 = vmul.f32 %v127, 2.0
    %v136 = vmul.f32 %v132, 2.0
    %v137 = vld [vmem:[%s3] sm:$0xff]
    %v138 = vld [vmem:[%s3 + $0x8] sm:$0xff]
    %140 = vset.pattern.permute.xlu0 0
    %141 = vperm.xlu0 %140, %v137
    %v142 = vpop.permute.xlu0 %141
    %145 = vset.pattern.permute.xlu0 0
    %146 = vperm.xlu0 %145, %v138
    %v147 = vpop.permute.xlu0 %146
    %v149 = vsub.f32 %v135, %v142
    %v150 = vsub.f32 %v136, %v147
    %vm151 = vcmask 64512
    %v152 = vsel %vm151, %v149, -inf
    %v153 = vsel %vm151, %v150, -inf
    %v154 = vmax.f32 %v152, %v153
    %v155 = vrot.slane %v154, 4
    %v156 = vmax.f32 %v154, %v155
    %v157 = vrot.slane %v156, 2
    %v158 = vmax.f32 %v156, %v157
    %v159 = vrot.slane %v158, 1
    %v160 = vmax.f32 %v158, %v159
    %v161 = vsub.f32 %v149, %v160
    %v162 = vsub.f32 %v150, %v160
    %v163 = vmul.f32 %v161, 1.442695
    %v164 = vpow.pop %v163
    %v165 = vmul.f32 %v162, 1.442695
    %v166 = vpow.pop %v165
    %v167 = vsel %vm151, %v164, 0.0
    %v168 = vsel %vm151, %v166, 0.0
    %v169 = vadd.f32 %v167, %v168
    %v170 = vrot.slane %v169, 4
    %v171 = vadd.f32 %v169, %v170
    %v172 = vrot.slane %v171, 2
    %v173 = vadd.f32 %v171, %v172
    %v174 = vrot.slane %v173, 1
    %v175 = vadd.f32 %v173, %v174
    %v176 = vrcp.pop %v175
    %v177 = vmul.f32 1.0, %v176
    %v178 = vlog2.pop %v175
    %v179 = vmul.f32 %v178, 0.6931472
    %v180 = vsub.f32 %v161, %v179
    %v181 = vsub.f32 %v162, %v179
    %v182 = vmul.f32 %v164, %v177
    %v183 = vmul.f32 %v166, %v177
    %v184 = vsel %vm151, %v182, 0.0
    %185 = vadd.xlane.f32.xlu0 %v184
    %v186 = vpop.xlane.xlu0 %185
    %v187 = vsel %vm151, %v183, 0.0
    %188 = vadd.xlane.f32.xlu0 %v187
    %v189 = vpop.xlane.xlu0 %188
    %v190 = vsel %vm151, %v180, 0.0
    %191 = vadd.xlane.f32.xlu0 %v190
    %v192 = vpop.xlane.xlu0 %191
    %v193 = vsel %vm151, %v181, 0.0
    %194 = vadd.xlane.f32.xlu0 %v193
    %v195 = vpop.xlane.xlu0 %194
    %vm196 = vcmask 7168
    %v197 = vsel %vm196, %v186, %v192
    %v198 = vsel %vm196, %v189, %v195
    %vm199 = vcmask 15360
    %200 = vst.msk [vmem:[%s6] sm:$0xff] %vm199, %v197
    %201 = vst.msk [vmem:[%s6 + $0x8] sm:$0xff] %vm199, %v198
    %202 = vmatprep.subr.mxu0 0.0
    %203 = vmatpush1.xpose.msra.mxu0 %v52
    %204 = vmatprep.subr.mxu0 0.0
    %205 = vmatpush1.xpose.msra.mxu0 %v55
    %206 = vmatprep.subr.mxu0 0.0
    %207 = vmatpush1.xpose.msra.mxu0 0.0
    %208 = vmatprep.subr.mxu0 0.0
    %209 = vmatpush1.xpose.msra.mxu0 0.0
    %210 = vmatprep.subr.mxu0 0.0
    %211 = vmatpush1.xpose.msra.mxu0 0.0
    %212 = vmatprep.subr.mxu0 0.0
    %213 = vmatpush1.xpose.msra.mxu0 0.0
    %214 = vmatprep.subr.mxu0 0.0
    %215 = vmatpush1.xpose.msra.mxu0 0.0
    %216 = vmatprep.subr.mxu0 0.0
    %217 = vmatpush1.xpose.msra.mxu0 0.0
    %218 = vmatprep.subr.mxu0 0.0
    %219 = vmatpush1.xpose.msra.mxu0 0.0
    %220 = vmatprep.subr.mxu0 0.0
    %221 = vmatpush1.xpose.msra.mxu0 0.0
    %222 = vmatprep.subr.mxu0 0.0
    %223 = vmatpush1.xpose.msra.mxu0 0.0
    %224 = vmatprep.subr.mxu0 0.0
    %225 = vmatpush1.xpose.msra.mxu0 0.0
    %226 = vmatprep.subr.mxu0 0.0
    %227 = vmatpush1.xpose.msra.mxu0 0.0
    %228 = vmatprep.subr.mxu0 0.0
    %229 = vmatpush1.xpose.msra.mxu0 0.0
    %230 = vmatprep.subr.mxu0 0.0
    %231 = vmatpush1.xpose.msra.mxu0 0.0
    %232 = vmatprep.subr.mxu0 0.0
    %233 = vmatpush1.xpose.msra.mxu0 0.0
    %234 = vmatprep.subr.mxu0 0.0
    %235 = vmatpush1.xpose.msra.mxu0 0.0
    %236 = vmatprep.subr.mxu0 0.0
    %237 = vmatpush1.xpose.msra.mxu0 0.0
    %238 = vmatprep.subr.mxu0 0.0
    %239 = vmatpush1.xpose.msra.mxu0 0.0
    %240 = vmatprep.subr.mxu0 0.0
    %241 = vmatpush1.xpose.msra.mxu0 0.0
    %242 = vmatprep.subr.mxu0 0.0
    %243 = vmatpush1.xpose.msra.mxu0 0.0
    %244 = vmatprep.subr.mxu0 0.0
    %245 = vmatpush1.xpose.msra.mxu0 0.0
    %246 = vmatprep.subr.mxu0 0.0
    %247 = vmatpush1.xpose.msra.mxu0 0.0
    %248 = vmatprep.subr.mxu0 0.0
    %249 = vmatpush1.xpose.msra.mxu0 0.0
    %250 = vmatprep.subr.mxu0 0.0
    %251 = vmatpush1.xpose.msra.mxu0 0.0
    %252 = vmatprep.subr.mxu0 0.0
    %253 = vmatpush1.xpose.msra.mxu0 0.0
    %254 = vmatprep.subr.mxu0 0.0
    %255 = vmatpush1.xpose.msra.mxu0 0.0
    %256 = vmatprep.subr.mxu0 0.0
    %257 = vmatpush1.xpose.msra.mxu0 0.0
    %258 = vmatprep.subr.mxu0 0.0
    %259 = vmatpush1.xpose.msra.mxu0 0.0
    %260 = vmatprep.subr.mxu0 0.0
    %261 = vmatpush1.xpose.msra.mxu0 0.0
    %262 = vmatprep.subr.mxu0 0.0
    %263 = vmatpush1.xpose.msra.mxu0 0.0
    %264 = vmatprep.subr.mxu0 0.0
    %265 = vmatpush1.xpose.msra.mxu0 0.0
    %266 = vmatprep.mubr.f32.mxu0 0.0
    %267 = vmatmul.mubr.f32.gmra.mrb[0].mxu0 %v58
    %v268 = vpop.f32.mrb[0].mxu0
    %v269 = vadd.f32 0.0, %v268
    %v270 = vpop.f32.mrb[0].mxu0
    %271 = vdwg.mxu0
    %v272 = vmul.f32 %v269, 2.0
    %v273 = vld [vmem:[#allocation5] sm:$0x1]
    %v275 = vlaneseq
    %v276 = vshrl.u32 %v275, 7
    %v277 = vsub.s32 0, %v276
    %v278 = vrot.slane %v273, %v277
    %v280 = vsub.f32 %v272, %v278
    %v281 = vld [vmem:[%s4] sm:$0xff]
    %v282 = vadd.f32 %v280, %v281
    %vm283 = vcmask 130048
    %v284 = vsel %vm283, %v282, -inf
    %285 = vmax.xlane.f32.xlu0 %v284
    %v286 = vpop.xlane.xlu0 %285
    %v287 = vlaneseq
    %v288 = vand.u32 %v287, 127
    %vm289 = vcmp.eq.f32.partialorder %v282, %v286
    %v290 = vsel %vm289, %v288, 16
    %v291 = vsel %vm283, %v290, 2147483647
    %v292 = vand.u32 %v291, 65535
    %v293 = vshra.s32 %v291, 16
    %v294 = vcvt.s32.f32 %v292
    %v295 = vcvt.s32.f32 %v293
    %296 = vmin.xlane.f32.xlu0 %v295
    %v297 = vpop.xlane.xlu0 %296
    %vm298 = vcmp.eq.f32.partialorder %v295, %v297
    %v299 = vsel %vm298, %v294, inf
    %300 = vmin.xlane.f32.xlu0 %v299
    %v301 = vpop.xlane.xlu0 %300
    %v302 = vcvt.f32.s32 %v301
    %v303 = vcvt.f32.s32 %v297
    %v304 = vshll.u32 %v303, 16
    %v305 = vadd.s32 %v304, %v302
    %vm306 = vcmp.eq.s32.totalorder %v288, %v305
    %v307 = vsel %vm306, 1, 0
    %v308 = vcvt.s32.f32 %v307
    %v310 = vsel %vm283, %v308, 0
    %312 = vmatprep.subr.mxu0 0.0
    %313 = vmatpush1.msra.mxu0 %v48
    %314 = vmatprep.subr.mxu0 0.0
    %315 = vmatpush1.msra.mxu0 %v49
    %316 = vmatprep.subr.mxu0 0.0
    %317 = vmatpush1.msra.mxu0 0.0
    %318 = vmatprep.subr.mxu0 0.0
    %319 = vmatpush1.msra.mxu0 0.0
    %320 = vmatprep.subr.mxu0 0.0
    %321 = vmatpush1.msra.mxu0 0.0
    %322 = vmatprep.subr.mxu0 0.0
    %323 = vmatpush1.msra.mxu0 0.0
    %324 = vmatprep.subr.mxu0 0.0
    %325 = vmatpush1.msra.mxu0 0.0
    %326 = vmatprep.subr.mxu0 0.0
    %327 = vmatpush1.msra.mxu0 0.0
    %328 = vmatprep.subr.mxu0 0.0
    %329 = vmatpush1.msra.mxu0 0.0
    %330 = vmatprep.subr.mxu0 0.0
    %331 = vmatpush1.msra.mxu0 0.0
    %332 = vmatprep.subr.mxu0 0.0
    %333 = vmatpush1.msra.mxu0 0.0
    %334 = vmatprep.subr.mxu0 0.0
    %335 = vmatpush1.msra.mxu0 0.0
    %336 = vmatprep.subr.mxu0 0.0
    %337 = vmatpush1.msra.mxu0 0.0
    %338 = vmatprep.subr.mxu0 0.0
    %339 = vmatpush1.msra.mxu0 0.0
    %340 = vmatprep.subr.mxu0 0.0
    %341 = vmatpush1.msra.mxu0 0.0
    %342 = vmatprep.subr.mxu0 0.0
    %343 = vmatpush1.msra.mxu0 0.0
    %344 = vmatprep.subr.mxu0 0.0
    %345 = vmatpush1.msra.mxu0 0.0
    %346 = vmatprep.subr.mxu0 0.0
    %347 = vmatpush1.msra.mxu0 0.0
    %348 = vmatprep.subr.mxu0 0.0
    %349 = vmatpush1.msra.mxu0 0.0
    %350 = vmatprep.subr.mxu0 0.0
    %351 = vmatpush1.msra.mxu0 0.0
    %352 = vmatprep.subr.mxu0 0.0
    %353 = vmatpush1.msra.mxu0 0.0
    %354 = vmatprep.subr.mxu0 0.0
    %355 = vmatpush1.msra.mxu0 0.0
    %356 = vmatprep.subr.mxu0 0.0
    %357 = vmatpush1.msra.mxu0 0.0
    %358 = vmatprep.subr.mxu0 0.0
    %359 = vmatpush1.msra.mxu0 0.0
    %360 = vmatprep.subr.mxu0 0.0
    %361 = vmatpush1.msra.mxu0 0.0
    %362 = vmatprep.subr.mxu0 0.0
    %363 = vmatpush1.msra.mxu0 0.0
    %364 = vmatprep.subr.mxu0 0.0
    %365 = vmatpush1.msra.mxu0 0.0
    %366 = vmatprep.subr.mxu0 0.0
    %367 = vmatpush1.msra.mxu0 0.0
    %368 = vmatprep.subr.mxu0 0.0
    %369 = vmatpush1.msra.mxu0 0.0
    %370 = vmatprep.subr.mxu0 0.0
    %371 = vmatpush1.msra.mxu0 0.0
    %372 = vmatprep.subr.mxu0 0.0
    %373 = vmatpush1.msra.mxu0 0.0
    %374 = vmatprep.subr.mxu0 0.0
    %375 = vmatpush1.msra.mxu0 0.0
    %376 = vmatprep.mubr.f32.mxu0 0.0
    %377 = vmatmul.mubr.f32.gmra.mrb[0].mxu0 %v310
    %v378 = vpop.f32.mrb[0].mxu0
    %v379 = vadd.f32 0.0, %v378
    %v380 = vpop.f32.mrb[0].mxu0
    %381 = vdwg.mxu0
    %382 = vst.msk [vmem:[#allocation7] sm:$0xff] %vm50, %v379
    // Predicated region
    $region30: #{tpu_custom_call.1} parent=1 // pred_check
      _
    $region31: #{tpu_custom_call.1} parent=1 // pred_check_branch
      %384 = sbr.rel (0) target = $region33
    $region32: #{tpu_custom_call.1} parent=1 // pred_region
      %s386 = ssub.s32 128, 128
      %387 = vsyncadd [#allocation4], %s386
      %s389 = sshll.u32 [#allocation7], 4
      %s390 = int_to_ptr.vmem [resolvable:$true] %s389
      %392 = dma.vmem_to_hbm [thread:$0]  %s390, 128, %s5, [#allocation4]
    $region33: #{tpu_custom_call.1} parent=1 // pred_fallthru
      _
    // Predicated region
    $region34: #{tpu_custom_call.1} parent=1 // pred_check
      _
    $region35: #{tpu_custom_call.1} parent=1 // pred_check_branch
      %394 = sbr.rel (0) target = $region37
    $region36: #{tpu_custom_call.1} parent=1 // pred_region
      _
    $region37: #{tpu_custom_call.1} parent=1 // pred_fallthru
      _
    // Predicated region
    $region38: #{tpu_custom_call.1} parent=1 // pred_check
      _
    $region39: #{tpu_custom_call.1} parent=1 // pred_check_branch
      %396 = sbr.rel (0) target = $region41
    $region40: #{tpu_custom_call.1} parent=1 // pred_region
      %397 = dma.done [#allocation4], 128
    $region41: #{tpu_custom_call.1} parent=1 // pred_fallthru
      _
    // Predicated region
    $region42: #{tpu_custom_call.1} parent=1 // pred_check
      _
    $region43: #{tpu_custom_call.1} parent=1 // pred_check_branch
      %399 = sbr.rel (0) target = $region45
    $region44: #{tpu_custom_call.1} parent=1 // pred_region
      _
    $region45: #{tpu_custom_call.1} parent=1 // pred_fallthru
      _
    %400 = vsyncpa [#allocation3], 1
    %401 = vsyncpa [#allocation6], 1
    %402 = vsyncpa [#allocation4], 1

</llo_original>
